<compile_context>
chip_gen: v7x
topology: tpu7x:2x2x1
jax: 0.10.0
libtpu: 0.0.40
codegen_flags: <defaults>
</compile_context>

<pallas_src>
import functools

import jax
import jax.numpy as jnp
from jax import lax
from jax.experimental import pallas as pl
from jax.experimental.pallas import tpu as pltpu

EPS = 1e-5  # PyTorch BatchNorm2d default eps


def _round_up(x, m):
    return (x + m - 1) // m * m


# ---------------- kernel 1: tiled bf16 matmul + BN partial statistics ----------------

def _mm_stats_kernel(a_ref, b_ref, y_ref, st_ref, acc_ref):
    k = pl.program_id(2)

    @pl.when(k == 0)
    def _init():
        acc_ref[...] = jnp.zeros_like(acc_ref)

    acc_ref[...] += jnp.dot(a_ref[...], b_ref[...],
                            preferred_element_type=jnp.float32)

    @pl.when(k == pl.num_programs(2) - 1)
    def _finalize():
        acc = acc_ref[...]
        y_ref[...] = acc
        # per-channel partial sums for BatchNorm (row 0 = sum, row 1 = sum of squares)
        s = jnp.sum(acc, axis=0, keepdims=True)
        ss = jnp.sum(acc * acc, axis=0, keepdims=True)
        pad = jnp.zeros((6, acc.shape[1]), jnp.float32)
        st_ref[0] = jnp.concatenate([s, ss, pad], axis=0)


def pallas_matmul_stats(a, b, *, tm_target=512, tn_target=256, tk_target=256):
    """(M,K)@(K,N) on the MXU with bf16 operands / f32 accumulation.

    Returns:
      y     : (Mp, Np) f32, zero-padded matmul result (Mp % tm == 0, Np % 128 == 0)
      stats : (Mp//tm, 8, Np) f32, stats[i,0]=column sums of the i-th M tile of y,
              stats[i,1]=column sums of squares, remaining rows zero.
    """
    M, K = a.shape
    Kb, N = b.shape
    assert Kb == K

    tm = min(tm_target, _round_up(M, 8))
    Mp = _round_up(M, tm)
    Kp = _round_up(K, 128)
    tk = tk_target if Kp % tk_target == 0 else 128
    Np = _round_up(N, 128)
    tn = tn_target if Np % tn_target == 0 else 128

    a_p = jnp.zeros((Mp, Kp), jnp.bfloat16).at[:M, :K].set(a.astype(jnp.bfloat16))
    b_p = jnp.zeros((Kp, Np), jnp.bfloat16).at[:K, :N].set(b.astype(jnp.bfloat16))

    mb, nb, kb = Mp // tm, Np // tn, Kp // tk
    y, stats = pl.pallas_call(
        _mm_stats_kernel,
        grid_spec=pltpu.PrefetchScalarGridSpec(
            num_scalar_prefetch=0,
            grid=(mb, nb, kb),
            in_specs=[pl.BlockSpec((tm, tk), lambda i, j, k: (i, k)),
                      pl.BlockSpec((tk, tn), lambda i, j, k: (k, j))],
            out_specs=[pl.BlockSpec((tm, tn), lambda i, j, k: (i, j)),
                       pl.BlockSpec((1, 8, tn), lambda i, j, k: (i, 0, j))],
            scratch_shapes=[pltpu.VMEM((tm, tn), jnp.float32)]),
        out_shape=(jax.ShapeDtypeStruct((Mp, Np), jnp.float32),
                   jax.ShapeDtypeStruct((mb, 8, Np), jnp.float32)),
        compiler_params=pltpu.CompilerParams(
            dimension_semantics=("parallel", "parallel", "arbitrary")),
    )(a_p, b_p)
    return y, stats


# -------- kernel 2: fused BatchNorm normalize (+optional residual) (+channel ReLU) --------

def _bn_body(y, st, g, b, rm, res, inv_count):
    totals = jnp.sum(st, axis=0)               # (8, Np): row 0 = sum, row 1 = sumsq
    mean = totals[0:1, :] * inv_count
    ex2 = totals[1:2, :] * inv_count
    var = jnp.maximum(ex2 - mean * mean, 0.0)  # clamp guards E[x^2]-E[x]^2 cancellation
    out = (y - mean) * lax.rsqrt(var + EPS) * g + b
    if res is not None:
        out = out + res
    # per-channel ReLU mask (lets conv1-BN-ReLU and align-BN share one kernel call)
    return jnp.where(rm > 0.0, jnp.maximum(out, 0.0), out)


def _bn_norm_kernel(y_ref, st_ref, g_ref, b_ref, rm_ref, o_ref, *, inv_count):
    o_ref[...] = _bn_body(y_ref[...], st_ref[...], g_ref[...], b_ref[...],
                          rm_ref[...], None, inv_count)


def _bn_norm_res_kernel(y_ref, st_ref, g_ref, b_ref, rm_ref, r_ref, o_ref, *, inv_count):
    o_ref[...] = _bn_body(y_ref[...], st_ref[...], g_ref[...], b_ref[...],
                          rm_ref[...], r_ref[...], inv_count)


def pallas_bn_norm(y, stats, gamma, beta, relu_mask, count, residual=None):
    """Training-mode BN over the leading (row) axis of y using the partial stats
    produced by pallas_matmul_stats.  Optionally adds a residual; applies ReLU on
    channels where relu_mask > 0."""
    Mp, Np = y.shape
    mb = stats.shape[0]
    tm = Mp // mb
    inv_count = 1.0 / float(count)

    in_specs = [pl.BlockSpec((tm, Np), lambda i: (i, 0)),
                pl.BlockSpec((mb, 8, Np), lambda i: (0, 0, 0)),
                pl.BlockSpec((1, Np), lambda i: (0, 0)),
                pl.BlockSpec((1, Np), lambda i: (0, 0)),
                pl.BlockSpec((1, Np), lambda i: (0, 0))]
    args = [y, stats, gamma, beta, relu_mask]
    if residual is None:
        kern = functools.partial(_bn_norm_kernel, inv_count=inv_count)
    else:
        in_specs.append(pl.BlockSpec((tm, Np), lambda i: (i, 0)))
        args.append(residual)
        kern = functools.partial(_bn_norm_res_kernel, inv_count=inv_count)

    return pl.pallas_call(
        kern,
        grid=(mb,),
        in_specs=in_specs,
        out_specs=pl.BlockSpec((tm, Np), lambda i: (i, 0)),
        out_shape=jax.ShapeDtypeStruct((Mp, Np), jnp.float32),
        compiler_params=pltpu.CompilerParams(dimension_semantics=("parallel",)),
    )(*args)


# ------------------------------------- glue -------------------------------------------

def _im2col(x, stride):
    """x: (N, H, W, C), 3x3 kernel, padding=1 -> ((N*Ho*Wo, 9*C), (N, Ho, Wo))."""
    N, H, W, C = x.shape
    xp = jnp.pad(x, ((0, 0), (1, 1), (1, 1), (0, 0)))
    Ho = (H - 1) // stride + 1
    Wo = (W - 1) // stride + 1
    cols = []
    for dh in range(3):
        for dw in range(3):
            patch = xp[:, dh:dh + (Ho - 1) * stride + 1:stride,
                       dw:dw + (Wo - 1) * stride + 1:stride, :]
            cols.append(patch)
    patches = jnp.concatenate(cols, axis=-1)         # (N, Ho, Wo, 9*C)
    return patches.reshape(N * Ho * Wo, 9 * C), (N, Ho, Wo)


def _wmat(w_oihw):
    """PyTorch conv weight (Cout, Cin, 3, 3) -> im2col matrix (9*Cin, Cout)."""
    cout, cin, _, _ = w_oihw.shape
    return jnp.transpose(w_oihw, (2, 3, 1, 0)).reshape(9 * cin, cout)


def _pad_cols(v, n_to, fill=0.0):
    v = jnp.asarray(v, jnp.float32)
    return jnp.pad(v, ((0, 0), (0, n_to - v.shape[1])), constant_values=fill)


def init_resblock_params(key, num_in, num_out, stride):
    k1, k2, k3 = jax.random.split(key, 3)
    params = {
        'conv1_w': 0.1 * jax.random.normal(k1, (num_out, num_in, 3, 3), jnp.float32),
        'bn1_g': jnp.ones((1, num_out), jnp.float32),
        'bn1_b': jnp.zeros((1, num_out), jnp.float32),
        'conv2_w': 0.1 * jax.random.normal(k2, (num_out, num_out, 3, 3), jnp.float32),
        'bn2_g': jnp.ones((1, num_out), jnp.float32),
        'bn2_b': jnp.zeros((1, num_out), jnp.float32),
    }
    if num_in != num_out or stride > 1:  # projection shortcut: conv3x3 + BN
        params['align_w'] = 0.1 * jax.random.normal(k3, (num_out, num_in, 3, 3), jnp.float32)
        params['align_g'] = jnp.ones((1, num_out), jnp.float32)
        params['align_b'] = jnp.zeros((1, num_out), jnp.float32)
    return params


def resblock_forward(params, x_nchw, stride):
    """Pallas implementation of ResBlock.forward (training-mode BatchNorm)."""
    x = jnp.transpose(x_nchw, (0, 2, 3, 1)).astype(jnp.float32)   # NCHW -> NHWC
    N, H, W, Cin = x.shape
    Cout = params['conv1_w'].shape[0]
    has_align = 'align_w' in params

    # TODO(synk): replace the XLA-side im2col with an in-kernel 9-tap accumulation
    # (shifted (M, Cin) views of the padded NHWC activation) to cut LHS HBM traffic ~9x.
    p1, (N, Ho, Wo) = _im2col(x, stride)
    M = N * Ho * Wo

    # conv1 (+ align conv if present) fused into a single matmul: identical LHS.
    if has_align:
        w1 = jnp.concatenate([_wmat(params['conv1_w']),
                              _wmat(params['align_w'])], axis=1)   # (9*Cin, 2*Cout)
        g1 = jnp.concatenate([params['bn1_g'], params['align_g']], axis=1)
        b1 = jnp.concatenate([params['bn1_b'], params['align_b']], axis=1)
        rm1 = jnp.concatenate([jnp.ones((1, Cout), jnp.float32),      # ReLU on bn1
                               jnp.zeros((1, Cout), jnp.float32)], axis=1)  # no ReLU on align BN
    else:
        w1 = _wmat(params['conv1_w'])
        g1, b1 = params['bn1_g'], params['bn1_b']
        rm1 = jnp.ones((1, Cout), jnp.float32)

    y1, st1 = pallas_matmul_stats(p1, w1)
    Np1 = y1.shape[1]
    o1a = pallas_bn_norm(y1, st1,
                         _pad_cols(g1, Np1, 1.0), _pad_cols(b1, Np1, 0.0),
                         _pad_cols(rm1, Np1, 0.0), count=M)
    o1 = o1a[:M, :Cout]                       # relu(bn1(conv1(x)))
    if has_align:
        res = o1a[:M, Cout:2 * Cout]          # bn(align_conv(x))
    else:
        res = x.reshape(M, Cin)               # identity shortcut (Cin == Cout, stride == 1)

    # conv2 (stride 1) -> bn2 + residual add + relu, fused into matmul+normalize.
    p2, _ = _im2col(o1.reshape(N, Ho, Wo, Cout), 1)
    y2, st2 = pallas_matmul_stats(p2, _wmat(params['conv2_w']))
    Mp2, Np2 = y2.shape
    res_p = jnp.pad(res, ((0, Mp2 - M), (0, Np2 - Cout)))
    out = pallas_bn_norm(y2, st2,
                         _pad_cols(params['bn2_g'], Np2, 1.0),
                         _pad_cols(params['bn2_b'], Np2, 0.0),
                         _pad_cols(jnp.ones((1, Cout), jnp.float32), Np2, 0.0),
                         count=M, residual=res_p)
    out = out[:M, :Cout].reshape(N, Ho, Wo, Cout)
    return jnp.transpose(out, (0, 3, 1, 2))                       # NHWC -> NCHW


# ------------------------- pure-JAX reference (correctness check) ------------------------

def _ref_bn(y, g, b, relu=False):
    mean = jnp.mean(y, axis=0, keepdims=True)
    var = jnp.mean((y - mean) ** 2, axis=0, keepdims=True)
    out = (y - mean) / jnp.sqrt(var + EPS) * g + b
    return jnp.maximum(out, 0.0) if relu else out


def resblock_reference(params, x_nchw, stride):
    hi = jax.lax.Precision.HIGHEST
    x = jnp.transpose(x_nchw, (0, 2, 3, 1)).astype(jnp.float32)
    N, H, W, Cin = x.shape
    Cout = params['conv1_w'].shape[0]
    p1, (N, Ho, Wo) = _im2col(x, stride)
    y1 = jnp.dot(p1, _wmat(params['conv1_w']), precision=hi)
    o1 = _ref_bn(y1, params['bn1_g'], params['bn1_b'], relu=True)
    p2, _ = _im2col(o1.reshape(N, Ho, Wo, Cout), 1)
    y2 = jnp.dot(p2, _wmat(params['conv2_w']), precision=hi)
    if 'align_w' in params:
        ya = jnp.dot(p1, _wmat(params['align_w']), precision=hi)
        res = _ref_bn(ya, params['align_g'], params['align_b'])
    else:
        res = x.reshape(N * H * W, Cin)
    out = jnp.maximum(_ref_bn(y2, params['bn2_g'], params['bn2_b']) + res, 0.0)
    return jnp.transpose(out.reshape(N, Ho, Wo, Cout), (0, 3, 1, 2))


# ----------------------------------------- main -----------------------------------------

if __name__ == "__main__":
    key = jax.random.PRNGKey(0)
    kx, kp1, kp2 = jax.random.split(key, 3)

    x = jax.random.normal(kx, (2, 4, 16, 16), jnp.float32)   # NCHW like PyTorch

    fwd = jax.jit(resblock_forward, static_argnums=2)

    # Case 1: projection shortcut (num_in=4 != num_out=8, stride=2)
    params1 = init_resblock_params(kp1, 4, 8, 2)
    out1 = jax.block_until_ready(fwd(params1, x, 2))
    assert out1.shape == (2, 8, 8, 8), out1.shape
    ref1 = resblock_reference(params1, x, 2)
    # bf16 MXU operands vs f32/HIGHEST reference -> tolerance sized for bf16 rounding.
    assert jnp.allclose(out1, ref1, atol=3e-2, rtol=3e-2), "mismatch (projection path)"

    # Case 2: identity shortcut (num_in == num_out, stride=1)
    params2 = init_resblock_params(kp2, 4, 4, 1)
    out2 = jax.block_until_ready(fwd(params2, x, 1))
    assert out2.shape == (2, 4, 16, 16), out2.shape
    ref2 = resblock_reference(params2, x, 1)
    assert jnp.allclose(out2, ref2, atol=3e-2, rtol=3e-2), "mismatch (identity path)"

    print("KERNEL_OK")
</pallas_src>

<mosaic_0001>
module attributes {stable_mosaic.version = 11 : i64} {
  func.func @_mm_stats_kernel(%arg0: i32, %arg1: i32, %arg2: i32, %arg3: memref<128x128xbf16, #tpu.memory_space<vmem>>, %arg4: memref<128x128xbf16, #tpu.memory_space<vmem>>, %arg5: memref<128x128xf32, #tpu.memory_space<vmem>>, %arg6: memref<1x8x128xf32, #tpu.memory_space<vmem>>, %arg7: memref<128x128xf32, #tpu.memory_space<vmem>>) attributes {dimension_semantics = [#tpu.dimension_semantics<parallel>, #tpu.dimension_semantics<parallel>, #tpu.dimension_semantics<arbitrary>], iteration_bounds = array<i64: 1, 1, 1>, scalar_prefetch = 0 : i64, scratch_operands = 1 : i64, tpu.core_type = #tpu.core_type<tc>, window_params = [{transform_indices = @transform_0, window_bounds = array<i64: 128, 128>}, {transform_indices = @transform_1, window_bounds = array<i64: 128, 128>}, {transform_indices = @transform_2, window_bounds = array<i64: 128, 128>}, {transform_indices = @transform_3, window_bounds = array<i64: 1, 8, 128>}]} {
    %c0_i32 = arith.constant 0 : i32
    %0 = arith.cmpi eq, %arg2, %c0_i32 : i32
    %1 = arith.extui %0 : i1 to i32
    %c0_i32_0 = arith.constant 0 : i32
    %2 = arith.cmpi ne, %1, %c0_i32_0 : i32
    scf.if %2 {
      %cst_10 = arith.constant 0.000000e+00 : f32
      %12 = vector.broadcast %cst_10 : f32 to vector<128x128xf32>
      %c0_11 = arith.constant 0 : index
      %c0_12 = arith.constant 0 : index
      %13 = vector.load %arg7[%c0_11, %c0_12] : memref<128x128xf32, #tpu.memory_space<vmem>>, vector<128x128xf32>
      tpu.vector_store %arg7[%c0_11, %c0_12], %12 {strides = array<i32>} : memref<128x128xf32, #tpu.memory_space<vmem>>, vector<128x128xf32>,
    } else {
    }
    %c0 = arith.constant 0 : index
    %c0_1 = arith.constant 0 : index
    %3 = vector.load %arg7[%c0, %c0_1] : memref<128x128xf32, #tpu.memory_space<vmem>>, vector<128x128xf32>
    %c0_2 = arith.constant 0 : index
    %c0_3 = arith.constant 0 : index
    %4 = vector.load %arg3[%c0_2, %c0_3] : memref<128x128xbf16, #tpu.memory_space<vmem>>, vector<128x128xbf16>
    %c0_4 = arith.constant 0 : index
    %c0_5 = arith.constant 0 : index
    %5 = vector.load %arg4[%c0_4, %c0_5] : memref<128x128xbf16, #tpu.memory_space<vmem>>, vector<128x128xbf16>
    %cst = arith.constant dense<0.000000e+00> : vector<128x128xf32>
    %6 = tpu.matmul %4, %5, %cst {dimension_numbers = #tpu.dot_dimension_numbers<[1], [0], [0], [1], [0, 0, 1, 1], [], []>} : vector<128x128xbf16>, vector<128x128xbf16>, vector<128x128xf32> -> vector<128x128xf32>
    %7 = arith.addf %3, %6 : vector<128x128xf32>
    %c0_6 = arith.constant 0 : index
    %c0_7 = arith.constant 0 : index
    %8 = vector.load %arg7[%c0_6, %c0_7] : memref<128x128xf32, #tpu.memory_space<vmem>>, vector<128x128xf32>
    tpu.vector_store %arg7[%c0_6, %c0_7], %7 {strides = array<i32>} : memref<128x128xf32, #tpu.memory_space<vmem>>, vector<128x128xf32>,
    %c0_i32_8 = arith.constant 0 : i32
    %9 = arith.cmpi eq, %arg2, %c0_i32_8 : i32
    %10 = arith.extui %9 : i1 to i32
    %c0_i32_9 = arith.constant 0 : i32
    %11 = arith.cmpi ne, %10, %c0_i32_9 : i32
    scf.if %11 {
      %c0_10 = arith.constant 0 : index
      %c0_11 = arith.constant 0 : index
      %12 = vector.load %arg7[%c0_10, %c0_11] : memref<128x128xf32, #tpu.memory_space<vmem>>, vector<128x128xf32>
      %c0_12 = arith.constant 0 : index
      %c0_13 = arith.constant 0 : index
      %13 = vector.load %arg5[%c0_12, %c0_13] : memref<128x128xf32, #tpu.memory_space<vmem>>, vector<128x128xf32>
      tpu.vector_store %arg5[%c0_12, %c0_13], %12 {strides = array<i32>} : memref<128x128xf32, #tpu.memory_space<vmem>>, vector<128x128xf32>,
      %cst_14 = arith.constant dense<0.000000e+00> : vector<128xf32>
      %14 = vector.multi_reduction <add>, %12, %cst_14 [0] : vector<128x128xf32> to vector<128xf32>
      %15 = vector.shape_cast %14 : vector<128xf32> to vector<1x128xf32>
      %16 = arith.mulf %12, %12 : vector<128x128xf32>
      %cst_15 = arith.constant dense<0.000000e+00> : vector<128xf32>
      %17 = vector.multi_reduction <add>, %16, %cst_15 [0] : vector<128x128xf32> to vector<128xf32>
      %18 = vector.shape_cast %17 : vector<128xf32> to vector<1x128xf32>
      %cst_16 = arith.constant 0.000000e+00 : f32
      %19 = vector.broadcast %cst_16 : f32 to vector<6x128xf32>
      %20 = tpu.concatenate %15, %18, %19 in 0 : vector<1x128xf32>, vector<1x128xf32>, vector<6x128xf32> -> vector<8x128xf32>
      %c0_17 = arith.constant 0 : index
      %c0_18 = arith.constant 0 : index
      %c0_19 = arith.constant 0 : index
      %21 = vector.load %arg6[%c0_17, %c0_18, %c0_19] : memref<1x8x128xf32, #tpu.memory_space<vmem>>, vector<1x8x128xf32>
      %22 = vector.shape_cast %21 : vector<1x8x128xf32> to vector<8x128xf32>
      %23 = vector.shape_cast %20 : vector<8x128xf32> to vector<1x8x128xf32>
      tpu.vector_store %arg6[%c0_17, %c0_18, %c0_19], %23 {strides = array<i32>} : memref<1x8x128xf32, #tpu.memory_space<vmem>>, vector<1x8x128xf32>,
    } else {
    }
    return
  }
  func.func @transform_0(%arg0: i32, %arg1: i32, %arg2: i32) -> (i32, i32) {
    %c0_i32 = arith.constant 0 : i32
    return %arg0, %arg2 : i32, i32
  }
  func.func @transform_1(%arg0: i32, %arg1: i32, %arg2: i32) -> (i32, i32) {
    %c0_i32 = arith.constant 0 : i32
    return %arg2, %arg1 : i32, i32
  }
  func.func @transform_2(%arg0: i32, %arg1: i32, %arg2: i32) -> (i32, i32) {
    %c0_i32 = arith.constant 0 : i32
    return %arg0, %arg1 : i32, i32
  }
  func.func @transform_3(%arg0: i32, %arg1: i32, %arg2: i32) -> (i32, i32, i32) {
    %c0_i32 = arith.constant 0 : i32
    %c0_i32_0 = arith.constant 0 : i32
    return %arg0, %c0_i32, %arg1 : i32, i32, i32
  }
}

module attributes {stable_mosaic.version = 11 : i64} {
  func.func @_bn_norm_kernel(%arg0: i32, %arg1: memref<128x128xf32, #tpu.memory_space<vmem>>, %arg2: memref<1x8x128xf32, #tpu.memory_space<vmem>>, %arg3: memref<1x128xf32, #tpu.memory_space<vmem>>, %arg4: memref<1x128xf32, #tpu.memory_space<vmem>>, %arg5: memref<1x128xf32, #tpu.memory_space<vmem>>, %arg6: memref<128x128xf32, #tpu.memory_space<vmem>>) attributes {dimension_semantics = [#tpu.dimension_semantics<parallel>], iteration_bounds = array<i64: 1>, scalar_prefetch = 0 : i64, scratch_operands = 0 : i64, tpu.core_type = #tpu.core_type<tc>, window_params = [{transform_indices = @transform_0, window_bounds = array<i64: 128, 128>}, {pipeline_mode = #tpu.pipeline_mode<synchronous>, transform_indices = @transform_1, window_bounds = array<i64: 1, 8, 128>}, {pipeline_mode = #tpu.pipeline_mode<synchronous>, transform_indices = @transform_2, window_bounds = array<i64: 1, 128>}, {pipeline_mode = #tpu.pipeline_mode<synchronous>, transform_indices = @transform_3, window_bounds = array<i64: 1, 128>}, {pipeline_mode = #tpu.pipeline_mode<synchronous>, transform_indices = @transform_4, window_bounds = array<i64: 1, 128>}, {transform_indices = @transform_5, window_bounds = array<i64: 128, 128>}]} {
    %c0 = arith.constant 0 : index
    %c0_0 = arith.constant 0 : index
    %0 = vector.load %arg1[%c0, %c0_0] : memref<128x128xf32, #tpu.memory_space<vmem>>, vector<128x128xf32>
    %c0_1 = arith.constant 0 : index
    %c0_2 = arith.constant 0 : index
    %c0_3 = arith.constant 0 : index
    %1 = vector.load %arg2[%c0_1, %c0_2, %c0_3] : memref<1x8x128xf32, #tpu.memory_space<vmem>>, vector<1x8x128xf32>
    %c0_4 = arith.constant 0 : index
    %c0_5 = arith.constant 0 : index
    %2 = vector.load %arg3[%c0_4, %c0_5] : memref<1x128xf32, #tpu.memory_space<vmem>>, vector<1x128xf32>
    %c0_6 = arith.constant 0 : index
    %c0_7 = arith.constant 0 : index
    %3 = vector.load %arg4[%c0_6, %c0_7] : memref<1x128xf32, #tpu.memory_space<vmem>>, vector<1x128xf32>
    %c0_8 = arith.constant 0 : index
    %c0_9 = arith.constant 0 : index
    %4 = vector.load %arg5[%c0_8, %c0_9] : memref<1x128xf32, #tpu.memory_space<vmem>>, vector<1x128xf32>
    %cst = arith.constant dense<0.000000e+00> : vector<8x128xf32>
    %5 = vector.multi_reduction <add>, %1, %cst [0] : vector<1x8x128xf32> to vector<8x128xf32>
    %6 = vector.extract_strided_slice %5 {offsets = [0, 0], sizes = [1, 128], strides = [1, 1]} : vector<8x128xf32> to vector<1x128xf32>
    %cst_10 = arith.constant 7.812500e-03 : f32
    %7 = vector.broadcast %cst_10 : f32 to vector<1x128xf32>
    %8 = arith.mulf %6, %7 : vector<1x128xf32>
    %9 = vector.extract_strided_slice %5 {offsets = [1, 0], sizes = [1, 128], strides = [1, 1]} : vector<8x128xf32> to vector<1x128xf32>
    %cst_11 = arith.constant 7.812500e-03 : f32
    %10 = vector.broadcast %cst_11 : f32 to vector<1x128xf32>
    %11 = arith.mulf %9, %10 : vector<1x128xf32>
    %12 = arith.mulf %8, %8 : vector<1x128xf32>
    %13 = arith.subf %11, %12 : vector<1x128xf32>
    %cst_12 = arith.constant 0.000000e+00 : f32
    %14 = vector.broadcast %cst_12 : f32 to vector<1x128xf32>
    %15 = arith.maximumf %13, %14 : vector<1x128xf32>
    %16 = vector.broadcast %8 : vector<1x128xf32> to vector<128x128xf32>
    %17 = arith.subf %0, %16 : vector<128x128xf32>
    %cst_13 = arith.constant 9.99999974E-6 : f32
    %18 = vector.broadcast %cst_13 : f32 to vector<1x128xf32>
    %19 = arith.addf %15, %18 : vector<1x128xf32>
    %20 = math.rsqrt %19 : vector<1x128xf32>
    %21 = vector.broadcast %20 : vector<1x128xf32> to vector<128x128xf32>
    %22 = arith.mulf %17, %21 : vector<128x128xf32>
    %23 = vector.broadcast %2 : vector<1x128xf32> to vector<128x128xf32>
    %24 = arith.mulf %22, %23 : vector<128x128xf32>
    %25 = vector.broadcast %3 : vector<1x128xf32> to vector<128x128xf32>
    %26 = arith.addf %24, %25 : vector<128x128xf32>
    %cst_14 = arith.constant 0.000000e+00 : f32
    %27 = vector.broadcast %cst_14 : f32 to vector<1x128xf32>
    %28 = arith.cmpf ogt, %4, %27 : vector<1x128xf32>
    %cst_15 = arith.constant 0.000000e+00 : f32
    %29 = vector.broadcast %cst_15 : f32 to vector<128x128xf32>
    %30 = arith.maximumf %26, %29 : vector<128x128xf32>
    %31 = vector.shape_cast %28 : vector<1x128xi1> to vector<1x128xi1>
    %32 = vector.broadcast %31 : vector<1x128xi1> to vector<128x128xi1>
    %33 = arith.select %32, %30, %26 : vector<128x128xi1>, vector<128x128xf32>
    %c0_16 = arith.constant 0 : index
    %c0_17 = arith.constant 0 : index
    %34 = vector.load %arg6[%c0_16, %c0_17] : memref<128x128xf32, #tpu.memory_space<vmem>>, vector<128x128xf32>
    tpu.vector_store %arg6[%c0_16, %c0_17], %33 {strides = array<i32>} : memref<128x128xf32, #tpu.memory_space<vmem>>, vector<128x128xf32>,
    return
  }
  func.func @transform_0(%arg0: i32) -> (i32, i32) {
    %c0_i32 = arith.constant 0 : i32
    %c0_i32_0 = arith.constant 0 : i32
    return %arg0, %c0_i32 : i32, i32
  }
  func.func @transform_1(%arg0: i32) -> (i32, i32, i32) {
    %c0_i32 = arith.constant 0 : i32
    %c0_i32_0 = arith.constant 0 : i32
    %c0_i32_1 = arith.constant 0 : i32
    %c0_i32_2 = arith.constant 0 : i32
    return %c0_i32, %c0_i32_0, %c0_i32_1 : i32, i32, i32
  }
  func.func @transform_2(%arg0: i32) -> (i32, i32) {
    %c0_i32 = arith.constant 0 : i32
    %c0_i32_0 = arith.constant 0 : i32
    %c0_i32_1 = arith.constant 0 : i32
    return %c0_i32, %c0_i32_0 : i32, i32
  }
  func.func @transform_3(%arg0: i32) -> (i32, i32) {
    %c0_i32 = arith.constant 0 : i32
    %c0_i32_0 = arith.constant 0 : i32
    %c0_i32_1 = arith.constant 0 : i32
    return %c0_i32, %c0_i32_0 : i32, i32
  }
  func.func @transform_4(%arg0: i32) -> (i32, i32) {
    %c0_i32 = arith.constant 0 : i32
    %c0_i32_0 = arith.constant 0 : i32
    %c0_i32_1 = arith.constant 0 : i32
    return %c0_i32, %c0_i32_0 : i32, i32
  }
  func.func @transform_5(%arg0: i32) -> (i32, i32) {
    %c0_i32 = arith.constant 0 : i32
    %c0_i32_0 = arith.constant 0 : i32
    return %arg0, %c0_i32 : i32, i32
  }
}

module attributes {stable_mosaic.version = 11 : i64} {
  func.func @_bn_norm_res_kernel(%arg0: i32, %arg1: memref<128x128xf32, #tpu.memory_space<vmem>>, %arg2: memref<1x8x128xf32, #tpu.memory_space<vmem>>, %arg3: memref<1x128xf32, #tpu.memory_space<vmem>>, %arg4: memref<1x128xf32, #tpu.memory_space<vmem>>, %arg5: memref<1x128xf32, #tpu.memory_space<vmem>>, %arg6: memref<128x128xf32, #tpu.memory_space<vmem>>, %arg7: memref<128x128xf32, #tpu.memory_space<vmem>>) attributes {dimension_semantics = [#tpu.dimension_semantics<parallel>], iteration_bounds = array<i64: 1>, scalar_prefetch = 0 : i64, scratch_operands = 0 : i64, tpu.core_type = #tpu.core_type<tc>, window_params = [{transform_indices = @transform_0, window_bounds = array<i64: 128, 128>}, {pipeline_mode = #tpu.pipeline_mode<synchronous>, transform_indices = @transform_1, window_bounds = array<i64: 1, 8, 128>}, {pipeline_mode = #tpu.pipeline_mode<synchronous>, transform_indices = @transform_2, window_bounds = array<i64: 1, 128>}, {pipeline_mode = #tpu.pipeline_mode<synchronous>, transform_indices = @transform_3, window_bounds = array<i64: 1, 128>}, {pipeline_mode = #tpu.pipeline_mode<synchronous>, transform_indices = @transform_4, window_bounds = array<i64: 1, 128>}, {transform_indices = @transform_5, window_bounds = array<i64: 128, 128>}, {transform_indices = @transform_6, window_bounds = array<i64: 128, 128>}]} {
    %c0 = arith.constant 0 : index
    %c0_0 = arith.constant 0 : index
    %0 = vector.load %arg1[%c0, %c0_0] : memref<128x128xf32, #tpu.memory_space<vmem>>, vector<128x128xf32>
    %c0_1 = arith.constant 0 : index
    %c0_2 = arith.constant 0 : index
    %c0_3 = arith.constant 0 : index
    %1 = vector.load %arg2[%c0_1, %c0_2, %c0_3] : memref<1x8x128xf32, #tpu.memory_space<vmem>>, vector<1x8x128xf32>
    %c0_4 = arith.constant 0 : index
    %c0_5 = arith.constant 0 : index
    %2 = vector.load %arg3[%c0_4, %c0_5] : memref<1x128xf32, #tpu.memory_space<vmem>>, vector<1x128xf32>
    %c0_6 = arith.constant 0 : index
    %c0_7 = arith.constant 0 : index
    %3 = vector.load %arg4[%c0_6, %c0_7] : memref<1x128xf32, #tpu.memory_space<vmem>>, vector<1x128xf32>
    %c0_8 = arith.constant 0 : index
    %c0_9 = arith.constant 0 : index
    %4 = vector.load %arg5[%c0_8, %c0_9] : memref<1x128xf32, #tpu.memory_space<vmem>>, vector<1x128xf32>
    %c0_10 = arith.constant 0 : index
    %c0_11 = arith.constant 0 : index
    %5 = vector.load %arg6[%c0_10, %c0_11] : memref<128x128xf32, #tpu.memory_space<vmem>>, vector<128x128xf32>
    %cst = arith.constant dense<0.000000e+00> : vector<8x128xf32>
    %6 = vector.multi_reduction <add>, %1, %cst [0] : vector<1x8x128xf32> to vector<8x128xf32>
    %7 = vector.extract_strided_slice %6 {offsets = [0, 0], sizes = [1, 128], strides = [1, 1]} : vector<8x128xf32> to vector<1x128xf32>
    %cst_12 = arith.constant 7.812500e-03 : f32
    %8 = vector.broadcast %cst_12 : f32 to vector<1x128xf32>
    %9 = arith.mulf %7, %8 : vector<1x128xf32>
    %10 = vector.extract_strided_slice %6 {offsets = [1, 0], sizes = [1, 128], strides = [1, 1]} : vector<8x128xf32> to vector<1x128xf32>
    %cst_13 = arith.constant 7.812500e-03 : f32
    %11 = vector.broadcast %cst_13 : f32 to vector<1x128xf32>
    %12 = arith.mulf %10, %11 : vector<1x128xf32>
    %13 = arith.mulf %9, %9 : vector<1x128xf32>
    %14 = arith.subf %12, %13 : vector<1x128xf32>
    %cst_14 = arith.constant 0.000000e+00 : f32
    %15 = vector.broadcast %cst_14 : f32 to vector<1x128xf32>
    %16 = arith.maximumf %14, %15 : vector<1x128xf32>
    %17 = vector.broadcast %9 : vector<1x128xf32> to vector<128x128xf32>
    %18 = arith.subf %0, %17 : vector<128x128xf32>
    %cst_15 = arith.constant 9.99999974E-6 : f32
    %19 = vector.broadcast %cst_15 : f32 to vector<1x128xf32>
    %20 = arith.addf %16, %19 : vector<1x128xf32>
    %21 = math.rsqrt %20 : vector<1x128xf32>
    %22 = vector.broadcast %21 : vector<1x128xf32> to vector<128x128xf32>
    %23 = arith.mulf %18, %22 : vector<128x128xf32>
    %24 = vector.broadcast %2 : vector<1x128xf32> to vector<128x128xf32>
    %25 = arith.mulf %23, %24 : vector<128x128xf32>
    %26 = vector.broadcast %3 : vector<1x128xf32> to vector<128x128xf32>
    %27 = arith.addf %25, %26 : vector<128x128xf32>
    %28 = arith.addf %27, %5 : vector<128x128xf32>
    %cst_16 = arith.constant 0.000000e+00 : f32
    %29 = vector.broadcast %cst_16 : f32 to vector<1x128xf32>
    %30 = arith.cmpf ogt, %4, %29 : vector<1x128xf32>
    %cst_17 = arith.constant 0.000000e+00 : f32
    %31 = vector.broadcast %cst_17 : f32 to vector<128x128xf32>
    %32 = arith.maximumf %28, %31 : vector<128x128xf32>
    %33 = vector.shape_cast %30 : vector<1x128xi1> to vector<1x128xi1>
    %34 = vector.broadcast %33 : vector<1x128xi1> to vector<128x128xi1>
    %35 = arith.select %34, %32, %28 : vector<128x128xi1>, vector<128x128xf32>
    %c0_18 = arith.constant 0 : index
    %c0_19 = arith.constant 0 : index
    %36 = vector.load %arg7[%c0_18, %c0_19] : memref<128x128xf32, #tpu.memory_space<vmem>>, vector<128x128xf32>
    tpu.vector_store %arg7[%c0_18, %c0_19], %35 {strides = array<i32>} : memref<128x128xf32, #tpu.memory_space<vmem>>, vector<128x128xf32>,
    return
  }
  func.func @transform_0(%arg0: i32) -> (i32, i32) {
    %c0_i32 = arith.constant 0 : i32
    %c0_i32_0 = arith.constant 0 : i32
    return %arg0, %c0_i32 : i32, i32
  }
  func.func @transform_1(%arg0: i32) -> (i32, i32, i32) {
    %c0_i32 = arith.constant 0 : i32
    %c0_i32_0 = arith.constant 0 : i32
    %c0_i32_1 = arith.constant 0 : i32
    %c0_i32_2 = arith.constant 0 : i32
    return %c0_i32, %c0_i32_0, %c0_i32_1 : i32, i32, i32
  }
  func.func @transform_2(%arg0: i32) -> (i32, i32) {
    %c0_i32 = arith.constant 0 : i32
    %c0_i32_0 = arith.constant 0 : i32
    %c0_i32_1 = arith.constant 0 : i32
    return %c0_i32, %c0_i32_0 : i32, i32
  }
  func.func @transform_3(%arg0: i32) -> (i32, i32) {
    %c0_i32 = arith.constant 0 : i32
    %c0_i32_0 = arith.constant 0 : i32
    %c0_i32_1 = arith.constant 0 : i32
    return %c0_i32, %c0_i32_0 : i32, i32
  }
  func.func @transform_4(%arg0: i32) -> (i32, i32) {
    %c0_i32 = arith.constant 0 : i32
    %c0_i32_0 = arith.constant 0 : i32
    %c0_i32_1 = arith.constant 0 : i32
    return %c0_i32, %c0_i32_0 : i32, i32
  }
  func.func @transform_5(%arg0: i32) -> (i32, i32) {
    %c0_i32 = arith.constant 0 : i32
    %c0_i32_0 = arith.constant 0 : i32
    return %arg0, %c0_i32 : i32, i32
  }
  func.func @transform_6(%arg0: i32) -> (i32, i32) {
    %c0_i32 = arith.constant 0 : i32
    %c0_i32_0 = arith.constant 0 : i32
    return %arg0, %c0_i32 : i32, i32
  }
}

</mosaic_0001>

<llo_original>
// kernel: resblock_forward.7
$region0: #{resblock_forward.7}
  #allocation0 [shape = 'u32[]', space=smem, size = 0x4, offset = 0x4, fixed_abs, tag = 'smem constant byte address 0x4 - core index']
  #allocation1 [shape = 'u32[144,128]{1,0:T(1,128)}', space=vmem, size = 0x12000, scoped, tag = 'internal scratch']
  %s0 = inlined_call_operand.vmem [shape: f32[128,128], index: 0, kind: input, shape index: {}]
  %s1 = inlined_call_operand.vmem [shape: f32[1,8,128], index: 1, kind: input, shape index: {}]
  %s2 = inlined_call_operand.vmem [shape: f32[1,128], index: 2, kind: input, shape index: {}]
  %s3 = inlined_call_operand.vmem [shape: f32[1,128], index: 3, kind: input, shape index: {}]
  %s4 = inlined_call_operand.vmem [shape: f32[1,128], index: 4, kind: input, shape index: {}]
  %s5 = inlined_call_operand.vmem [shape: f32[128,128], index: 5, kind: input, shape index: {}]
  %s6 = inlined_call_operand.vmem [shape: f32[128,128], index: 6, kind: output, shape index: {}]
  %s7 = sld [smem:[#allocation0]]
  $region34: #{resblock_forward.7} parent=0
    _
  %s9 = ssub.s32 1, %s7
  %s10 = scalar_select 0, %s9, %s7
  // Predicated region
  $region2: #{resblock_forward.7} parent=0 // pred_check
    _
  $region3: #{resblock_forward.7} parent=0 // pred_check_branch
    %12 = sbr.rel (0) target = $region5
  $region4: #{resblock_forward.7} parent=0 // pred_region
    _
  $region5: #{resblock_forward.7} parent=0 // pred_fallthru
    _
  // Predicated region
  $region6: #{resblock_forward.7} parent=0 // pred_check
    _
  $region7: #{resblock_forward.7} parent=0 // pred_check_branch
    %14 = sbr.rel (0) target = $region9
  $region8: #{resblock_forward.7} parent=0 // pred_region
    _
  $region9: #{resblock_forward.7} parent=0 // pred_fallthru
    _
  // Predicated region
  $region10: #{resblock_forward.7} parent=0 // pred_check
    _
  $region11: #{resblock_forward.7} parent=0 // pred_check_branch
    %16 = sbr.rel (0) target = $region13
  $region12: #{resblock_forward.7} parent=0 // pred_region
    _
  $region13: #{resblock_forward.7} parent=0 // pred_fallthru
    _
  // Predicated region
  $region14: #{resblock_forward.7} parent=0 // pred_check
    _
  $region15: #{resblock_forward.7} parent=0 // pred_check_branch
    %18 = sbr.rel (0) target = $region17
  $region16: #{resblock_forward.7} parent=0 // pred_region
    _
  $region17: #{resblock_forward.7} parent=0 // pred_fallthru
    _
  // Predicated region
  $region18: #{resblock_forward.7} parent=0 // pred_check
    _
  $region19: #{resblock_forward.7} parent=0 // pred_check_branch
    %20 = sbr.rel (0) target = $region21
  $region20: #{resblock_forward.7} parent=0 // pred_region
    _
  $region21: #{resblock_forward.7} parent=0 // pred_fallthru
    _
  // Predicated region
  $region22: #{resblock_forward.7} parent=0 // pred_check
    _
  $region23: #{resblock_forward.7} parent=0 // pred_check_branch
    %22 = sbr.rel (0) target = $region25
  $region24: #{resblock_forward.7} parent=0 // pred_region
    _
  $region25: #{resblock_forward.7} parent=0 // pred_fallthru
    _
  %v23 = vld [vmem:[%s0] sm:$0xff]
  %v24 = vld [vmem:[%s0 + $0x8] sm:$0xff]
  %v25 = vld [vmem:[%s0 + $0x10] sm:$0xff]
  %v26 = vld [vmem:[%s0 + $0x18] sm:$0xff]
  %v27 = vld [vmem:[%s0 + $0x20] sm:$0xff]
  %v28 = vld [vmem:[%s0 + $0x28] sm:$0xff]
  %v29 = vld [vmem:[%s0 + $0x30] sm:$0xff]
  %v30 = vld [vmem:[%s0 + $0x38] sm:$0xff]
  %v31 = vld [vmem:[%s0 + $0x40] sm:$0xff]
  %v32 = vld [vmem:[%s0 + $0x48] sm:$0xff]
  %v33 = vld [vmem:[%s0 + $0x50] sm:$0xff]
  %v34 = vld [vmem:[%s0 + $0x58] sm:$0xff]
  %v35 = vld [vmem:[%s0 + $0x60] sm:$0xff]
  %v36 = vld [vmem:[%s0 + $0x68] sm:$0xff]
  %v37 = vld [vmem:[%s0 + $0x70] sm:$0xff]
  %v38 = vld [vmem:[%s0 + $0x78] sm:$0xff]
  %v39 = vld [vmem:[%s1] sm:$0xff]
  %v40 = vld [vmem:[%s2] sm:$0x1]
  %v41 = vld [vmem:[%s3] sm:$0x1]
  %v42 = vld [vmem:[%s4] sm:$0x1]
  %v43 = vld [vmem:[%s5] sm:$0xff]
  %v44 = vld [vmem:[%s5 + $0x8] sm:$0xff]
  %v45 = vld [vmem:[%s5 + $0x10] sm:$0xff]
  %v46 = vld [vmem:[%s5 + $0x18] sm:$0xff]
  %v47 = vld [vmem:[%s5 + $0x20] sm:$0xff]
  %v48 = vld [vmem:[%s5 + $0x28] sm:$0xff]
  %v49 = vld [vmem:[%s5 + $0x30] sm:$0xff]
  %v50 = vld [vmem:[%s5 + $0x38] sm:$0xff]
  %v51 = vld [vmem:[%s5 + $0x40] sm:$0xff]
  %v52 = vld [vmem:[%s5 + $0x48] sm:$0xff]
  %v53 = vld [vmem:[%s5 + $0x50] sm:$0xff]
  %v54 = vld [vmem:[%s5 + $0x58] sm:$0xff]
  %v55 = vld [vmem:[%s5 + $0x60] sm:$0xff]
  %v56 = vld [vmem:[%s5 + $0x68] sm:$0xff]
  %v57 = vld [vmem:[%s5 + $0x70] sm:$0xff]
  %v58 = vld [vmem:[%s5 + $0x78] sm:$0xff]
  %v59 = vadd.f32 %v39, 0.0
  %v60 = vmul.f32 %v59, 0.0078125
  %v61 = vmul.f32 %v60, %v60
  %v63 = vrot.slane %v61, 7
  %v65 = vsub.f32 %v60, %v63
  %v66 = vmax.f32 %v65, 0.0
  %v67 = vlaneseq
  %v68 = vshrl.u32 %v67, 7
  %v69 = vsub.s32 0, %v68
  %v70 = vrot.slane %v60, %v69
  %v71 = vsub.f32 %v23, %v70
  %v72 = vsub.f32 %v24, %v70
  %v73 = vsub.f32 %v25, %v70
  %v74 = vsub.f32 %v26, %v70
  %v75 = vsub.f32 %v27, %v70
  %v76 = vsub.f32 %v28, %v70
  %v77 = vsub.f32 %v29, %v70
  %v78 = vsub.f32 %v30, %v70
  %v79 = vsub.f32 %v31, %v70
  %v80 = vsub.f32 %v32, %v70
  %v81 = vsub.f32 %v33, %v70
  %v82 = vsub.f32 %v34, %v70
  %v83 = vsub.f32 %v35, %v70
  %v84 = vsub.f32 %v36, %v70
  %v85 = vsub.f32 %v37, %v70
  %v86 = vsub.f32 %v38, %v70
  %v87 = vadd.f32 %v66, 1e-05
  %v88 = vrsqrt.pop %v87
  %v89 = vlaneseq
  %v90 = vshrl.u32 %v89, 7
  %v91 = vsub.s32 1, %v90
  %v92 = vrot.slane %v88, %v91
  %v93 = vmul.f32 %v71, %v92
  %v94 = vmul.f32 %v72, %v92
  %v95 = vmul.f32 %v73, %v92
  %v96 = vmul.f32 %v74, %v92
  %v97 = vmul.f32 %v75, %v92
  %v98 = vmul.f32 %v76, %v92
  %v99 = vmul.f32 %v77, %v92
  %v100 = vmul.f32 %v78, %v92
  %v101 = vmul.f32 %v79, %v92
  %v102 = vmul.f32 %v80, %v92
  %v103 = vmul.f32 %v81, %v92
  %v104 = vmul.f32 %v82, %v92
  %v105 = vmul.f32 %v83, %v92
  %v106 = vmul.f32 %v84, %v92
  %v107 = vmul.f32 %v85, %v92
  %v108 = vmul.f32 %v86, %v92
  %v110 = vlaneseq
  %v111 = vshrl.u32 %v110, 7
  %v112 = vsub.s32 0, %v111
  %v113 = vrot.slane %v40, %v112
  %v115 = vmul.f32 %v93, %v113
  %v116 = vmul.f32 %v94, %v113
  %v117 = vmul.f32 %v95, %v113
  %v118 = vmul.f32 %v96, %v113
  %v119 = vmul.f32 %v97, %v113
  %v120 = vmul.f32 %v98, %v113
  %v121 = vmul.f32 %v99, %v113
  %v122 = vmul.f32 %v100, %v113
  %v123 = vmul.f32 %v101, %v113
  %v124 = vmul.f32 %v102, %v113
  %v125 = vmul.f32 %v103, %v113
  %v126 = vmul.f32 %v104, %v113
  %v127 = vmul.f32 %v105, %v113
  %v128 = vmul.f32 %v106, %v113
  %v129 = vmul.f32 %v107, %v113
  %v130 = vmul.f32 %v108, %v113
  %v132 = vlaneseq
  %v133 = vshrl.u32 %v132, 7
  %v134 = vsub.s32 0, %v133
  %v135 = vrot.slane %v41, %v134
  %v137 = vadd.f32 %v115, %v135
  %v138 = vadd.f32 %v116, %v135
  %v139 = vadd.f32 %v117, %v135
  %v140 = vadd.f32 %v118, %v135
  %v141 = vadd.f32 %v119, %v135
  %v142 = vadd.f32 %v120, %v135
  %v143 = vadd.f32 %v121, %v135
  %v144 = vadd.f32 %v122, %v135
  %v145 = vadd.f32 %v123, %v135
  %v146 = vadd.f32 %v124, %v135
  %v147 = vadd.f32 %v125, %v135
  %v148 = vadd.f32 %v126, %v135
  %v149 = vadd.f32 %v127, %v135
  %v150 = vadd.f32 %v128, %v135
  %v151 = vadd.f32 %v129, %v135
  %v152 = vadd.f32 %v130, %v135
  %v153 = vadd.f32 %v137, %v43
  %v154 = vadd.f32 %v138, %v44
  %v155 = vadd.f32 %v139, %v45
  %v156 = vadd.f32 %v140, %v46
  %v157 = vadd.f32 %v141, %v47
  %v158 = vadd.f32 %v142, %v48
  %v159 = vadd.f32 %v143, %v49
  %v160 = vadd.f32 %v144, %v50
  %v161 = vadd.f32 %v145, %v51
  %v162 = vadd.f32 %v146, %v52
  %v163 = vadd.f32 %v147, %v53
  %v164 = vadd.f32 %v148, %v54
  %v165 = vadd.f32 %v149, %v55
  %v166 = vadd.f32 %v150, %v56
  %v167 = vadd.f32 %v151, %v57
  %v168 = vadd.f32 %v152, %v58
  %vm169 = vcmp.gt.f32.partialorder %v42, 0.0
  %v170 = vmax.f32 %v153, 0.0
  %v171 = vmax.f32 %v154, 0.0
  %v172 = vmax.f32 %v155, 0.0
  %v173 = vmax.f32 %v156, 0.0
  %v174 = vmax.f32 %v157, 0.0
  %v175 = vmax.f32 %v158, 0.0
  %v176 = vmax.f32 %v159, 0.0
  %v177 = vmax.f32 %v160, 0.0
  %v178 = vmax.f32 %v161, 0.0
  %v179 = vmax.f32 %v162, 0.0
  %v180 = vmax.f32 %v163, 0.0
  %v181 = vmax.f32 %v164, 0.0
  %v182 = vmax.f32 %v165, 0.0
  %v183 = vmax.f32 %v166, 0.0
  %v184 = vmax.f32 %v167, 0.0
  %v185 = vmax.f32 %v168, 0.0
  %v186 = vsel %vm169, 1, 0
  %v187 = vlaneseq
  %v188 = vshrl.u32 %v187, 7
  %v189 = vsub.s32 0, %v188
  %v190 = vrot.slane %v186, %v189
  %vm191 = vcmp.eq.s32.totalorder %v190, 1
  %v192 = vsel %vm191, %v170, %v153
  %v193 = vsel %vm191, %v171, %v154
  %v194 = vsel %vm191, %v172, %v155
  %v195 = vsel %vm191, %v173, %v156
  %v196 = vsel %vm191, %v174, %v157
  %v197 = vsel %vm191, %v175, %v158
  %v198 = vsel %vm191, %v176, %v159
  %v199 = vsel %vm191, %v177, %v160
  %v200 = vsel %vm191, %v178, %v161
  %v201 = vsel %vm191, %v179, %v162
  %v202 = vsel %vm191, %v180, %v163
  %v203 = vsel %vm191, %v181, %v164
  %v204 = vsel %vm191, %v182, %v165
  %v205 = vsel %vm191, %v183, %v166
  %v206 = vsel %vm191, %v184, %v167
  %v207 = vsel %vm191, %v185, %v168
  %208 = vst [vmem:[%s6] sm:$0xff] %v192
  %209 = vst [vmem:[%s6 + $0x8] sm:$0xff] %v193
  %210 = vst [vmem:[%s6 + $0x10] sm:$0xff] %v194
  %211 = vst [vmem:[%s6 + $0x18] sm:$0xff] %v195
  %212 = vst [vmem:[%s6 + $0x20] sm:$0xff] %v196
  %213 = vst [vmem:[%s6 + $0x28] sm:$0xff] %v197
  %214 = vst [vmem:[%s6 + $0x30] sm:$0xff] %v198
  %215 = vst [vmem:[%s6 + $0x38] sm:$0xff] %v199
  %216 = vst [vmem:[%s6 + $0x40] sm:$0xff] %v200
  %217 = vst [vmem:[%s6 + $0x48] sm:$0xff] %v201
  %218 = vst [vmem:[%s6 + $0x50] sm:$0xff] %v202
  %219 = vst [vmem:[%s6 + $0x58] sm:$0xff] %v203
  %220 = vst [vmem:[%s6 + $0x60] sm:$0xff] %v204
  %221 = vst [vmem:[%s6 + $0x68] sm:$0xff] %v205
  %222 = vst [vmem:[%s6 + $0x70] sm:$0xff] %v206
  %223 = vst [vmem:[%s6 + $0x78] sm:$0xff] %v207
  // Predicated region
  $region26: #{resblock_forward.7} parent=0 // pred_check
    _
  $region27: #{resblock_forward.7} parent=0 // pred_check_branch
    %225 = sbr.rel (0) target = $region29
  $region28: #{resblock_forward.7} parent=0 // pred_region
    _
  $region29: #{resblock_forward.7} parent=0 // pred_fallthru
    _
  // Predicated region
  $region30: #{resblock_forward.7} parent=0 // pred_check
    _
  $region31: #{resblock_forward.7} parent=0 // pred_check_branch
    %227 = sbr.rel (0) target = $region33
  $region32: #{resblock_forward.7} parent=0 // pred_region
    _
  $region33: #{resblock_forward.7} parent=0 // pred_fallthru
    _

// kernel: resblock_forward.5
$region0: #{resblock_forward.5}
  #allocation0 [shape = 'u32[]', space=smem, size = 0x4, offset = 0x4, fixed_abs, tag = 'smem constant byte address 0x4 - core index']
  #allocation1 [shape = 'u32[144,128]{1,0:T(1,128)}', space=vmem, size = 0x12000, scoped, tag = 'internal scratch']
  %s0 = inlined_call_operand.vmem [shape: f32[128,128], index: 0, kind: input, shape index: {}]
  %s1 = inlined_call_operand.vmem [shape: f32[1,8,128], index: 1, kind: input, shape index: {}]
  %s2 = inlined_call_operand.vmem [shape: f32[1,128], index: 2, kind: input, shape index: {}]
  %s3 = inlined_call_operand.vmem [shape: f32[1,128], index: 3, kind: input, shape index: {}]
  %s4 = inlined_call_operand.vmem [shape: f32[1,128], index: 4, kind: input, shape index: {}]
  %s5 = inlined_call_operand.vmem [shape: f32[128,128], index: 5, kind: output, shape index: {}]
  %s6 = sld [smem:[#allocation0]]
  $region30: #{resblock_forward.5} parent=0
    _
  %s8 = ssub.s32 1, %s6
  %s9 = scalar_select 0, %s8, %s6
  // Predicated region
  $region2: #{resblock_forward.5} parent=0 // pred_check
    _
  $region3: #{resblock_forward.5} parent=0 // pred_check_branch
    %11 = sbr.rel (0) target = $region5
  $region4: #{resblock_forward.5} parent=0 // pred_region
    _
  $region5: #{resblock_forward.5} parent=0 // pred_fallthru
    _
  // Predicated region
  $region6: #{resblock_forward.5} parent=0 // pred_check
    _
  $region7: #{resblock_forward.5} parent=0 // pred_check_branch
    %13 = sbr.rel (0) target = $region9
  $region8: #{resblock_forward.5} parent=0 // pred_region
    _
  $region9: #{resblock_forward.5} parent=0 // pred_fallthru
    _
  // Predicated region
  $region10: #{resblock_forward.5} parent=0 // pred_check
    _
  $region11: #{resblock_forward.5} parent=0 // pred_check_branch
    %15 = sbr.rel (0) target = $region13
  $region12: #{resblock_forward.5} parent=0 // pred_region
    _
  $region13: #{resblock_forward.5} parent=0 // pred_fallthru
    _
  // Predicated region
  $region14: #{resblock_forward.5} parent=0 // pred_check
    _
  $region15: #{resblock_forward.5} parent=0 // pred_check_branch
    %17 = sbr.rel (0) target = $region17
  $region16: #{resblock_forward.5} parent=0 // pred_region
    _
  $region17: #{resblock_forward.5} parent=0 // pred_fallthru
    _
  // Predicated region
  $region18: #{resblock_forward.5} parent=0 // pred_check
    _
  $region19: #{resblock_forward.5} parent=0 // pred_check_branch
    %19 = sbr.rel (0) target = $region21
  $region20: #{resblock_forward.5} parent=0 // pred_region
    _
  $region21: #{resblock_forward.5} parent=0 // pred_fallthru
    _
  %v20 = vld [vmem:[%s0] sm:$0xff]
  %v21 = vld [vmem:[%s0 + $0x8] sm:$0xff]
  %v22 = vld [vmem:[%s0 + $0x10] sm:$0xff]
  %v23 = vld [vmem:[%s0 + $0x18] sm:$0xff]
  %v24 = vld [vmem:[%s0 + $0x20] sm:$0xff]
  %v25 = vld [vmem:[%s0 + $0x28] sm:$0xff]
  %v26 = vld [vmem:[%s0 + $0x30] sm:$0xff]
  %v27 = vld [vmem:[%s0 + $0x38] sm:$0xff]
  %v28 = vld [vmem:[%s0 + $0x40] sm:$0xff]
  %v29 = vld [vmem:[%s0 + $0x48] sm:$0xff]
  %v30 = vld [vmem:[%s0 + $0x50] sm:$0xff]
  %v31 = vld [vmem:[%s0 + $0x58] sm:$0xff]
  %v32 = vld [vmem:[%s0 + $0x60] sm:$0xff]
  %v33 = vld [vmem:[%s0 + $0x68] sm:$0xff]
  %v34 = vld [vmem:[%s0 + $0x70] sm:$0xff]
  %v35 = vld [vmem:[%s0 + $0x78] sm:$0xff]
  %v36 = vld [vmem:[%s1] sm:$0xff]
  %v37 = vld [vmem:[%s2] sm:$0x1]
  %v38 = vld [vmem:[%s3] sm:$0x1]
  %v39 = vld [vmem:[%s4] sm:$0x1]
  %v40 = vadd.f32 %v36, 0.0
  %v41 = vmul.f32 %v40, 0.0078125
  %v42 = vmul.f32 %v41, %v41
  %v44 = vrot.slane %v42, 7
  %v46 = vsub.f32 %v41, %v44
  %v47 = vmax.f32 %v46, 0.0
  %v48 = vlaneseq
  %v49 = vshrl.u32 %v48, 7
  %v50 = vsub.s32 0, %v49
  %v51 = vrot.slane %v41, %v50
  %v52 = vsub.f32 %v20, %v51
  %v53 = vsub.f32 %v21, %v51
  %v54 = vsub.f32 %v22, %v51
  %v55 = vsub.f32 %v23, %v51
  %v56 = vsub.f32 %v24, %v51
  %v57 = vsub.f32 %v25, %v51
  %v58 = vsub.f32 %v26, %v51
  %v59 = vsub.f32 %v27, %v51
  %v60 = vsub.f32 %v28, %v51
  %v61 = vsub.f32 %v29, %v51
  %v62 = vsub.f32 %v30, %v51
  %v63 = vsub.f32 %v31, %v51
  %v64 = vsub.f32 %v32, %v51
  %v65 = vsub.f32 %v33, %v51
  %v66 = vsub.f32 %v34, %v51
  %v67 = vsub.f32 %v35, %v51
  %v68 = vadd.f32 %v47, 1e-05
  %v69 = vrsqrt.pop %v68
  %v70 = vlaneseq
  %v71 = vshrl.u32 %v70, 7
  %v72 = vsub.s32 1, %v71
  %v73 = vrot.slane %v69, %v72
  %v74 = vmul.f32 %v52, %v73
  %v75 = vmul.f32 %v53, %v73
  %v76 = vmul.f32 %v54, %v73
  %v77 = vmul.f32 %v55, %v73
  %v78 = vmul.f32 %v56, %v73
  %v79 = vmul.f32 %v57, %v73
  %v80 = vmul.f32 %v58, %v73
  %v81 = vmul.f32 %v59, %v73
  %v82 = vmul.f32 %v60, %v73
  %v83 = vmul.f32 %v61, %v73
  %v84 = vmul.f32 %v62, %v73
  %v85 = vmul.f32 %v63, %v73
  %v86 = vmul.f32 %v64, %v73
  %v87 = vmul.f32 %v65, %v73
  %v88 = vmul.f32 %v66, %v73
  %v89 = vmul.f32 %v67, %v73
  %v91 = vlaneseq
  %v92 = vshrl.u32 %v91, 7
  %v93 = vsub.s32 0, %v92
  %v94 = vrot.slane %v37, %v93
  %v96 = vmul.f32 %v74, %v94
  %v97 = vmul.f32 %v75, %v94
  %v98 = vmul.f32 %v76, %v94
  %v99 = vmul.f32 %v77, %v94
  %v100 = vmul.f32 %v78, %v94
  %v101 = vmul.f32 %v79, %v94
  %v102 = vmul.f32 %v80, %v94
  %v103 = vmul.f32 %v81, %v94
  %v104 = vmul.f32 %v82, %v94
  %v105 = vmul.f32 %v83, %v94
  %v106 = vmul.f32 %v84, %v94
  %v107 = vmul.f32 %v85, %v94
  %v108 = vmul.f32 %v86, %v94
  %v109 = vmul.f32 %v87, %v94
  %v110 = vmul.f32 %v88, %v94
  %v111 = vmul.f32 %v89, %v94
  %v113 = vlaneseq
  %v114 = vshrl.u32 %v113, 7
  %v115 = vsub.s32 0, %v114
  %v116 = vrot.slane %v38, %v115
  %v118 = vadd.f32 %v96, %v116
  %v119 = vadd.f32 %v97, %v116
  %v120 = vadd.f32 %v98, %v116
  %v121 = vadd.f32 %v99, %v116
  %v122 = vadd.f32 %v100, %v116
  %v123 = vadd.f32 %v101, %v116
  %v124 = vadd.f32 %v102, %v116
  %v125 = vadd.f32 %v103, %v116
  %v126 = vadd.f32 %v104, %v116
  %v127 = vadd.f32 %v105, %v116
  %v128 = vadd.f32 %v106, %v116
  %v129 = vadd.f32 %v107, %v116
  %v130 = vadd.f32 %v108, %v116
  %v131 = vadd.f32 %v109, %v116
  %v132 = vadd.f32 %v110, %v116
  %v133 = vadd.f32 %v111, %v116
  %vm134 = vcmp.gt.f32.partialorder %v39, 0.0
  %v135 = vmax.f32 %v118, 0.0
  %v136 = vmax.f32 %v119, 0.0
  %v137 = vmax.f32 %v120, 0.0
  %v138 = vmax.f32 %v121, 0.0
  %v139 = vmax.f32 %v122, 0.0
  %v140 = vmax.f32 %v123, 0.0
  %v141 = vmax.f32 %v124, 0.0
  %v142 = vmax.f32 %v125, 0.0
  %v143 = vmax.f32 %v126, 0.0
  %v144 = vmax.f32 %v127, 0.0
  %v145 = vmax.f32 %v128, 0.0
  %v146 = vmax.f32 %v129, 0.0
  %v147 = vmax.f32 %v130, 0.0
  %v148 = vmax.f32 %v131, 0.0
  %v149 = vmax.f32 %v132, 0.0
  %v150 = vmax.f32 %v133, 0.0
  %v151 = vsel %vm134, 1, 0
  %v152 = vlaneseq
  %v153 = vshrl.u32 %v152, 7
  %v154 = vsub.s32 0, %v153
  %v155 = vrot.slane %v151, %v154
  %vm156 = vcmp.eq.s32.totalorder %v155, 1
  %v157 = vsel %vm156, %v135, %v118
  %v158 = vsel %vm156, %v136, %v119
  %v159 = vsel %vm156, %v137, %v120
  %v160 = vsel %vm156, %v138, %v121
  %v161 = vsel %vm156, %v139, %v122
  %v162 = vsel %vm156, %v140, %v123
  %v163 = vsel %vm156, %v141, %v124
  %v164 = vsel %vm156, %v142, %v125
  %v165 = vsel %vm156, %v143, %v126
  %v166 = vsel %vm156, %v144, %v127
  %v167 = vsel %vm156, %v145, %v128
  %v168 = vsel %vm156, %v146, %v129
  %v169 = vsel %vm156, %v147, %v130
  %v170 = vsel %vm156, %v148, %v131
  %v171 = vsel %vm156, %v149, %v132
  %v172 = vsel %vm156, %v150, %v133
  %173 = vst [vmem:[%s5] sm:$0xff] %v157
  %174 = vst [vmem:[%s5 + $0x8] sm:$0xff] %v158
  %175 = vst [vmem:[%s5 + $0x10] sm:$0xff] %v159
  %176 = vst [vmem:[%s5 + $0x18] sm:$0xff] %v160
  %177 = vst [vmem:[%s5 + $0x20] sm:$0xff] %v161
  %178 = vst [vmem:[%s5 + $0x28] sm:$0xff] %v162
  %179 = vst [vmem:[%s5 + $0x30] sm:$0xff] %v163
  %180 = vst [vmem:[%s5 + $0x38] sm:$0xff] %v164
  %181 = vst [vmem:[%s5 + $0x40] sm:$0xff] %v165
  %182 = vst [vmem:[%s5 + $0x48] sm:$0xff] %v166
  %183 = vst [vmem:[%s5 + $0x50] sm:$0xff] %v167
  %184 = vst [vmem:[%s5 + $0x58] sm:$0xff] %v168
  %185 = vst [vmem:[%s5 + $0x60] sm:$0xff] %v169
  %186 = vst [vmem:[%s5 + $0x68] sm:$0xff] %v170
  %187 = vst [vmem:[%s5 + $0x70] sm:$0xff] %v171
  %188 = vst [vmem:[%s5 + $0x78] sm:$0xff] %v172
  // Predicated region
  $region22: #{resblock_forward.5} parent=0 // pred_check
    _
  $region23: #{resblock_forward.5} parent=0 // pred_check_branch
    %190 = sbr.rel (0) target = $region25
  $region24: #{resblock_forward.5} parent=0 // pred_region
    _
  $region25: #{resblock_forward.5} parent=0 // pred_fallthru
    _
  // Predicated region
  $region26: #{resblock_forward.5} parent=0 // pred_check
    _
  $region27: #{resblock_forward.5} parent=0 // pred_check_branch
    %192 = sbr.rel (0) target = $region29
  $region28: #{resblock_forward.5} parent=0 // pred_region
    _
  $region29: #{resblock_forward.5} parent=0 // pred_fallthru
    _

// kernel: resblock_forward.4
$region0: #{resblock_forward.4}
  #allocation0 [shape = 'u32[]', space=smem, size = 0x4, offset = 0x4, fixed_abs, tag = 'smem constant byte address 0x4 - core index']
  #allocation1 [shape = 'u32[144,128]{1,0:T(1,128)}', space=vmem, size = 0x12000, scoped, tag = 'internal scratch']
  #allocation2 [shape = 'f32[128,128]{1,0:T(8,128)}', space=vmem, size = 0x10000, scoped, tag = 'scratch operand']
  %s0 = inlined_call_operand.vmem [shape: bf16[128,128], index: 0, kind: input, shape index: {}]
  %s1 = inlined_call_operand.vmem [shape: bf16[128,128], index: 1, kind: input, shape index: {}]
  %s2 = inlined_call_operand.vmem [shape: f32[128,128], index: 2, kind: output, shape index: {0}]
  %s3 = inlined_call_operand.vmem [shape: f32[1,8,128], index: 3, kind: output, shape index: {1}]
  %4 = xla_tuple %s2, %s3
  %s5 = sld [smem:[#allocation0]]
  $region34: #{resblock_forward.4} parent=0
    _
  %s7 = ssub.s32 1, %s5
  %s8 = scalar_select 0, %s7, %s5
  // Predicated region
  $region2: #{resblock_forward.4} parent=0 // pred_check
    _
  $region3: #{resblock_forward.4} parent=0 // pred_check_branch
    %10 = sbr.rel (0) target = $region5
  $region4: #{resblock_forward.4} parent=0 // pred_region
    _
  $region5: #{resblock_forward.4} parent=0 // pred_fallthru
    _
  // Predicated region
  $region6: #{resblock_forward.4} parent=0 // pred_check
    _
  $region7: #{resblock_forward.4} parent=0 // pred_check_branch
    %12 = sbr.rel (0) target = $region9
  $region8: #{resblock_forward.4} parent=0 // pred_region
    _
  $region9: #{resblock_forward.4} parent=0 // pred_fallthru
    _
  %p14 = scmp.eq.s32.totalorder 0, 0
  // Predicated region
  $region10: #{resblock_forward.4} parent=0 // pred_check
    %p15 = pneg %p14
  $region11: #{resblock_forward.4} parent=0 // pred_check_branch
    %17 = sbr.rel (%p15) target = $region13
  $region12: #{resblock_forward.4} parent=0 // pred_region
    %18 = vst [vmem:[#allocation2] sm:$0xff] 0.0
    %19 = vst [vmem:[#allocation2 + $0x8] sm:$0xff] 0.0
    %20 = vst [vmem:[#allocation2 + $0x10] sm:$0xff] 0.0
    %21 = vst [vmem:[#allocation2 + $0x18] sm:$0xff] 0.0
    %22 = vst [vmem:[#allocation2 + $0x20] sm:$0xff] 0.0
    %23 = vst [vmem:[#allocation2 + $0x28] sm:$0xff] 0.0
    %24 = vst [vmem:[#allocation2 + $0x30] sm:$0xff] 0.0
    %25 = vst [vmem:[#allocation2 + $0x38] sm:$0xff] 0.0
    %26 = vst [vmem:[#allocation2 + $0x40] sm:$0xff] 0.0
    %27 = vst [vmem:[#allocation2 + $0x48] sm:$0xff] 0.0
    %28 = vst [vmem:[#allocation2 + $0x50] sm:$0xff] 0.0
    %29 = vst [vmem:[#allocation2 + $0x58] sm:$0xff] 0.0
    %30 = vst [vmem:[#allocation2 + $0x60] sm:$0xff] 0.0
    %31 = vst [vmem:[#allocation2 + $0x68] sm:$0xff] 0.0
    %32 = vst [vmem:[#allocation2 + $0x70] sm:$0xff] 0.0
    %33 = vst [vmem:[#allocation2 + $0x78] sm:$0xff] 0.0
  $region13: #{resblock_forward.4} parent=0 // pred_fallthru
    _
  %v34 = vld [vmem:[#allocation2] sm:$0xff]
  %v35 = vld [vmem:[#allocation2 + $0x8] sm:$0xff]
  %v36 = vld [vmem:[#allocation2 + $0x10] sm:$0xff]
  %v37 = vld [vmem:[#allocation2 + $0x18] sm:$0xff]
  %v38 = vld [vmem:[#allocation2 + $0x20] sm:$0xff]
  %v39 = vld [vmem:[#allocation2 + $0x28] sm:$0xff]
  %v40 = vld [vmem:[#allocation2 + $0x30] sm:$0xff]
  %v41 = vld [vmem:[#allocation2 + $0x38] sm:$0xff]
  %v42 = vld [vmem:[#allocation2 + $0x40] sm:$0xff]
  %v43 = vld [vmem:[#allocation2 + $0x48] sm:$0xff]
  %v44 = vld [vmem:[#allocation2 + $0x50] sm:$0xff]
  %v45 = vld [vmem:[#allocation2 + $0x58] sm:$0xff]
  %v46 = vld [vmem:[#allocation2 + $0x60] sm:$0xff]
  %v47 = vld [vmem:[#allocation2 + $0x68] sm:$0xff]
  %v48 = vld [vmem:[#allocation2 + $0x70] sm:$0xff]
  %v49 = vld [vmem:[#allocation2 + $0x78] sm:$0xff]
  %v50 = vld [vmem:[%s0] sm:$0xf]
  %v51 = vld [vmem:[%s0 + $0x4] sm:$0xf]
  %v52 = vld [vmem:[%s0 + $0x8] sm:$0xf]
  %v53 = vld [vmem:[%s0 + $0xc] sm:$0xf]
  %v54 = vld [vmem:[%s0 + $0x10] sm:$0xf]
  %v55 = vld [vmem:[%s0 + $0x14] sm:$0xf]
  %v56 = vld [vmem:[%s0 + $0x18] sm:$0xf]
  %v57 = vld [vmem:[%s0 + $0x1c] sm:$0xf]
  %v58 = vld [vmem:[%s0 + $0x20] sm:$0xf]
  %v59 = vld [vmem:[%s0 + $0x24] sm:$0xf]
  %v60 = vld [vmem:[%s0 + $0x28] sm:$0xf]
  %v61 = vld [vmem:[%s0 + $0x2c] sm:$0xf]
  %v62 = vld [vmem:[%s0 + $0x30] sm:$0xf]
  %v63 = vld [vmem:[%s0 + $0x34] sm:$0xf]
  %v64 = vld [vmem:[%s0 + $0x38] sm:$0xf]
  %v65 = vld [vmem:[%s0 + $0x3c] sm:$0xf]
  %v66 = vld [vmem:[%s1] sm:$0xf]
  %v67 = vld [vmem:[%s1 + $0x4] sm:$0xf]
  %v68 = vld [vmem:[%s1 + $0x8] sm:$0xf]
  %v69 = vld [vmem:[%s1 + $0xc] sm:$0xf]
  %v70 = vld [vmem:[%s1 + $0x10] sm:$0xf]
  %v71 = vld [vmem:[%s1 + $0x14] sm:$0xf]
  %v72 = vld [vmem:[%s1 + $0x18] sm:$0xf]
  %v73 = vld [vmem:[%s1 + $0x1c] sm:$0xf]
  %v74 = vld [vmem:[%s1 + $0x20] sm:$0xf]
  %v75 = vld [vmem:[%s1 + $0x24] sm:$0xf]
  %v76 = vld [vmem:[%s1 + $0x28] sm:$0xf]
  %v77 = vld [vmem:[%s1 + $0x2c] sm:$0xf]
  %v78 = vld [vmem:[%s1 + $0x30] sm:$0xf]
  %v79 = vld [vmem:[%s1 + $0x34] sm:$0xf]
  %v80 = vld [vmem:[%s1 + $0x38] sm:$0xf]
  %v81 = vld [vmem:[%s1 + $0x3c] sm:$0xf]
  %v98 = vunpack.c.l.b16 %v50
  %v99 = vunpack.c.l.b16 %v51
  %v100 = vunpack.c.l.b16 %v52
  %v101 = vunpack.c.l.b16 %v53
  %v102 = vunpack.c.l.b16 %v54
  %v103 = vunpack.c.l.b16 %v55
  %v104 = vunpack.c.l.b16 %v56
  %v105 = vunpack.c.l.b16 %v57
  %v106 = vunpack.c.l.b16 %v58
  %v107 = vunpack.c.l.b16 %v59
  %v108 = vunpack.c.l.b16 %v60
  %v109 = vunpack.c.l.b16 %v61
  %v110 = vunpack.c.l.b16 %v62
  %v111 = vunpack.c.l.b16 %v63
  %v112 = vunpack.c.l.b16 %v64
  %v113 = vunpack.c.l.b16 %v65
  %v114 = vpack.c.b16 %v99, %v98
  %v115 = vpack.c.b16 %v101, %v100
  %v116 = vpack.c.b16 %v103, %v102
  %v117 = vpack.c.b16 %v105, %v104
  %v118 = vpack.c.b16 %v107, %v106
  %v119 = vpack.c.b16 %v109, %v108
  %v120 = vpack.c.b16 %v111, %v110
  %v121 = vpack.c.b16 %v113, %v112
  %v146 = vunpack.c.l.b16 %v66
  %v147 = vunpack.c.l.b16 %v67
  %v148 = vunpack.c.l.b16 %v68
  %v149 = vunpack.c.l.b16 %v69
  %v150 = vunpack.c.l.b16 %v70
  %v151 = vunpack.c.l.b16 %v71
  %v152 = vunpack.c.l.b16 %v72
  %v153 = vunpack.c.l.b16 %v73
  %v154 = vunpack.c.l.b16 %v74
  %v155 = vunpack.c.l.b16 %v75
  %v156 = vunpack.c.l.b16 %v76
  %v157 = vunpack.c.l.b16 %v77
  %v158 = vunpack.c.l.b16 %v78
  %v159 = vunpack.c.l.b16 %v79
  %v160 = vunpack.c.l.b16 %v80
  %v161 = vunpack.c.l.b16 %v81
  %v162 = vpack.c.b16 %v147, %v146
  %v163 = vpack.c.b16 %v149, %v148
  %v164 = vpack.c.b16 %v151, %v150
  %v165 = vpack.c.b16 %v153, %v152
  %v166 = vpack.c.b16 %v155, %v154
  %v167 = vpack.c.b16 %v157, %v156
  %v168 = vpack.c.b16 %v159, %v158
  %v169 = vpack.c.b16 %v161, %v160
  %178 = vmatprep.subr.bf16.mxu0 0
  %179 = vmatpush1.bf16.msra.mxu0 %v162
  %180 = vmatprep.subr.bf16.mxu0 0
  %181 = vmatpush1.bf16.msra.mxu0 %v163
  %182 = vmatprep.subr.bf16.mxu0 0
  %183 = vmatpush1.bf16.msra.mxu0 %v164
  %184 = vmatprep.subr.bf16.mxu0 0
  %185 = vmatpush1.bf16.msra.mxu0 %v165
  %186 = vmatprep.subr.bf16.mxu0 0
  %187 = vmatpush1.bf16.msra.mxu0 %v166
  %188 = vmatprep.subr.bf16.mxu0 0
  %189 = vmatpush1.bf16.msra.mxu0 %v167
  %190 = vmatprep.subr.bf16.mxu0 0
  %191 = vmatpush1.bf16.msra.mxu0 %v168
  %192 = vmatprep.subr.bf16.mxu0 0
  %193 = vmatpush1.bf16.msra.mxu0 %v169
  %194 = vmatprep.subr.bf16.mxu0 0
  %195 = vmatpush1.bf16.msra.mxu0 0
  %196 = vmatprep.subr.bf16.mxu0 0
  %197 = vmatpush1.bf16.msra.mxu0 0
  %198 = vmatprep.subr.bf16.mxu0 0
  %199 = vmatpush1.bf16.msra.mxu0 0
  %200 = vmatprep.subr.bf16.mxu0 0
  %201 = vmatpush1.bf16.msra.mxu0 0
  %202 = vmatprep.subr.bf16.mxu0 0
  %203 = vmatpush1.bf16.msra.mxu0 0
  %204 = vmatprep.subr.bf16.mxu0 0
  %205 = vmatpush1.bf16.msra.mxu0 0
  %206 = vmatprep.subr.bf16.mxu0 0
  %207 = vmatpush1.bf16.msra.mxu0 0
  %208 = vmatprep.subr.bf16.mxu0 0
  %209 = vmatpush1.bf16.msra.mxu0 0
  %210 = vmatprep.mubr.bf16.mxu0 0
  %211 = vmatmul.mubr.bf16.gmra.mrb[0].mxu0 %v114
  %v212 = vpop.f32.mrb[0].mxu0
  %v213 = vadd.f32 0.0, %v212
  %v214 = vpop.f32.mrb[0].mxu0
  %v215 = vpop.f32.mrb[0].mxu0
  %v216 = vadd.f32 0.0, %v215
  %v217 = vpop.f32.mrb[0].mxu0
  %218 = vmatprep.mubr.bf16.mxu0 0
  %219 = vmatmul.mubr.bf16.gmra.mrb[0].mxu0 %v115
  %v220 = vpop.f32.mrb[0].mxu0
  %v221 = vadd.f32 0.0, %v220
  %v222 = vpop.f32.mrb[0].mxu0
  %v223 = vpop.f32.mrb[0].mxu0
  %v224 = vadd.f32 0.0, %v223
  %v225 = vpop.f32.mrb[0].mxu0
  %226 = vmatprep.mubr.bf16.mxu0 0
  %227 = vmatmul.mubr.bf16.gmra.mrb[0].mxu0 %v116
  %v228 = vpop.f32.mrb[0].mxu0
  %v229 = vadd.f32 0.0, %v228
  %v230 = vpop.f32.mrb[0].mxu0
  %v231 = vpop.f32.mrb[0].mxu0
  %v232 = vadd.f32 0.0, %v231
  %v233 = vpop.f32.mrb[0].mxu0
  %234 = vmatprep.mubr.bf16.mxu0 0
  %235 = vmatmul.mubr.bf16.gmra.mrb[0].mxu0 %v117
  %v236 = vpop.f32.mrb[0].mxu0
  %v237 = vadd.f32 0.0, %v236
  %v238 = vpop.f32.mrb[0].mxu0
  %v239 = vpop.f32.mrb[0].mxu0
  %v240 = vadd.f32 0.0, %v239
  %v241 = vpop.f32.mrb[0].mxu0
  %242 = vmatprep.mubr.bf16.mxu0 0
  %243 = vmatmul.mubr.bf16.gmra.mrb[0].mxu0 %v118
  %v244 = vpop.f32.mrb[0].mxu0
  %v245 = vadd.f32 0.0, %v244
  %v246 = vpop.f32.mrb[0].mxu0
  %v247 = vpop.f32.mrb[0].mxu0
  %v248 = vadd.f32 0.0, %v247
  %v249 = vpop.f32.mrb[0].mxu0
  %250 = vmatprep.mubr.bf16.mxu0 0
  %251 = vmatmul.mubr.bf16.gmra.mrb[0].mxu0 %v119
  %v252 = vpop.f32.mrb[0].mxu0
  %v253 = vadd.f32 0.0, %v252
  %v254 = vpop.f32.mrb[0].mxu0
  %v255 = vpop.f32.mrb[0].mxu0
  %v256 = vadd.f32 0.0, %v255
  %v257 = vpop.f32.mrb[0].mxu0
  %258 = vmatprep.mubr.bf16.mxu0 0
  %259 = vmatmul.mubr.bf16.gmra.mrb[0].mxu0 %v120
  %v260 = vpop.f32.mrb[0].mxu0
  %v261 = vadd.f32 0.0, %v260
  %v262 = vpop.f32.mrb[0].mxu0
  %v263 = vpop.f32.mrb[0].mxu0
  %v264 = vadd.f32 0.0, %v263
  %v265 = vpop.f32.mrb[0].mxu0
  %266 = vmatprep.mubr.bf16.mxu0 0
  %267 = vmatmul.mubr.bf16.gmra.mrb[0].mxu0 %v121
  %v268 = vpop.f32.mrb[0].mxu0
  %v269 = vadd.f32 0.0, %v268
  %v270 = vpop.f32.mrb[0].mxu0
  %v271 = vpop.f32.mrb[0].mxu0
  %v272 = vadd.f32 0.0, %v271
  %v273 = vpop.f32.mrb[0].mxu0
  %274 = vdwg.mxu0
  %v275 = vadd.f32 %v34, %v213
  %v276 = vadd.f32 %v35, %v216
  %v277 = vadd.f32 %v36, %v221
  %v278 = vadd.f32 %v37, %v224
  %v279 = vadd.f32 %v38, %v229
  %v280 = vadd.f32 %v39, %v232
  %v281 = vadd.f32 %v40, %v237
  %v282 = vadd.f32 %v41, %v240
  %v283 = vadd.f32 %v42, %v245
  %v284 = vadd.f32 %v43, %v248
  %v285 = vadd.f32 %v44, %v253
  %v286 = vadd.f32 %v45, %v256
  %v287 = vadd.f32 %v46, %v261
  %v288 = vadd.f32 %v47, %v264
  %v289 = vadd.f32 %v48, %v269
  %v290 = vadd.f32 %v49, %v272
  %291 = vst [vmem:[#allocation2] sm:$0xff] %v275
  %292 = vst [vmem:[#allocation2 + $0x8] sm:$0xff] %v276
  %293 = vst [vmem:[#allocation2 + $0x10] sm:$0xff] %v277
  %294 = vst [vmem:[#allocation2 + $0x18] sm:$0xff] %v278
  %295 = vst [vmem:[#allocation2 + $0x20] sm:$0xff] %v279
  %296 = vst [vmem:[#allocation2 + $0x28] sm:$0xff] %v280
  %297 = vst [vmem:[#allocation2 + $0x30] sm:$0xff] %v281
  %298 = vst [vmem:[#allocation2 + $0x38] sm:$0xff] %v282
  %299 = vst [vmem:[#allocation2 + $0x40] sm:$0xff] %v283
  %300 = vst [vmem:[#allocation2 + $0x48] sm:$0xff] %v284
  %301 = vst [vmem:[#allocation2 + $0x50] sm:$0xff] %v285
  %302 = vst [vmem:[#allocation2 + $0x58] sm:$0xff] %v286
  %303 = vst [vmem:[#allocation2 + $0x60] sm:$0xff] %v287
  %304 = vst [vmem:[#allocation2 + $0x68] sm:$0xff] %v288
  %305 = vst [vmem:[#allocation2 + $0x70] sm:$0xff] %v289
  %306 = vst [vmem:[#allocation2 + $0x78] sm:$0xff] %v290
  // Predicated region
  $region14: #{resblock_forward.4} parent=0 // pred_check
    %p307 = pneg %p14
  $region15: #{resblock_forward.4} parent=0 // pred_check_branch
    %309 = sbr.rel (%p307) target = $region17
  $region16: #{resblock_forward.4} parent=0 // pred_region
    %v310 = vld [vmem:[#allocation2] sm:$0xff]
    %v311 = vld [vmem:[#allocation2 + $0x8] sm:$0xff]
    %v312 = vld [vmem:[#allocation2 + $0x10] sm:$0xff]
    %v313 = vld [vmem:[#allocation2 + $0x18] sm:$0xff]
    %v314 = vld [vmem:[#allocation2 + $0x20] sm:$0xff]
    %v315 = vld [vmem:[#allocation2 + $0x28] sm:$0xff]
    %v316 = vld [vmem:[#allocation2 + $0x30] sm:$0xff]
    %v317 = vld [vmem:[#allocation2 + $0x38] sm:$0xff]
    %v318 = vld [vmem:[#allocation2 + $0x40] sm:$0xff]
    %v319 = vld [vmem:[#allocation2 + $0x48] sm:$0xff]
    %v320 = vld [vmem:[#allocation2 + $0x50] sm:$0xff]
    %v321 = vld [vmem:[#allocation2 + $0x58] sm:$0xff]
    %v322 = vld [vmem:[#allocation2 + $0x60] sm:$0xff]
    %v323 = vld [vmem:[#allocation2 + $0x68] sm:$0xff]
    %v324 = vld [vmem:[#allocation2 + $0x70] sm:$0xff]
    %v325 = vld [vmem:[#allocation2 + $0x78] sm:$0xff]
    %326 = vst [vmem:[%s2] sm:$0xff] %v310
    %327 = vst [vmem:[%s2 + $0x8] sm:$0xff] %v311
    %328 = vst [vmem:[%s2 + $0x10] sm:$0xff] %v312
    %329 = vst [vmem:[%s2 + $0x18] sm:$0xff] %v313
    %330 = vst [vmem:[%s2 + $0x20] sm:$0xff] %v314
    %331 = vst [vmem:[%s2 + $0x28] sm:$0xff] %v315
    %332 = vst [vmem:[%s2 + $0x30] sm:$0xff] %v316
    %333 = vst [vmem:[%s2 + $0x38] sm:$0xff] %v317
    %334 = vst [vmem:[%s2 + $0x40] sm:$0xff] %v318
    %335 = vst [vmem:[%s2 + $0x48] sm:$0xff] %v319
    %336 = vst [vmem:[%s2 + $0x50] sm:$0xff] %v320
    %337 = vst [vmem:[%s2 + $0x58] sm:$0xff] %v321
    %338 = vst [vmem:[%s2 + $0x60] sm:$0xff] %v322
    %339 = vst [vmem:[%s2 + $0x68] sm:$0xff] %v323
    %340 = vst [vmem:[%s2 + $0x70] sm:$0xff] %v324
    %341 = vst [vmem:[%s2 + $0x78] sm:$0xff] %v325
    %v342 = vadd.f32 %v310, %v311
    %v343 = vadd.f32 %v342, %v312
    %v344 = vadd.f32 %v343, %v313
    %v345 = vadd.f32 %v344, %v314
    %v346 = vadd.f32 %v345, %v315
    %v347 = vadd.f32 %v346, %v316
    %v348 = vadd.f32 %v347, %v317
    %v349 = vadd.f32 %v348, %v318
    %v350 = vadd.f32 %v349, %v319
    %v351 = vadd.f32 %v350, %v320
    %v352 = vadd.f32 %v351, %v321
    %v353 = vadd.f32 %v352, %v322
    %v354 = vadd.f32 %v353, %v323
    %v355 = vadd.f32 %v354, %v324
    %v356 = vadd.f32 %v355, %v325
    %v357 = vrot.slane %v356, 4
    %v358 = vadd.f32 %v356, %v357
    %v359 = vrot.slane %v358, 2
    %v360 = vadd.f32 %v358, %v359
    %v361 = vrot.slane %v360, 1
    %v362 = vadd.f32 %v360, %v361
    %v363 = vmul.f32 %v310, %v310
    %v364 = vmul.f32 %v311, %v311
    %v365 = vmul.f32 %v312, %v312
    %v366 = vmul.f32 %v313, %v313
    %v367 = vmul.f32 %v314, %v314
    %v368 = vmul.f32 %v315, %v315
    %v369 = vmul.f32 %v316, %v316
    %v370 = vmul.f32 %v317, %v317
    %v371 = vmul.f32 %v318, %v318
    %v372 = vmul.f32 %v319, %v319
    %v373 = vmul.f32 %v320, %v320
    %v374 = vmul.f32 %v321, %v321
    %v375 = vmul.f32 %v322, %v322
    %v376 = vmul.f32 %v323, %v323
    %v377 = vmul.f32 %v324, %v324
    %v378 = vmul.f32 %v325, %v325
    %v379 = vadd.f32 %v363, %v364
    %v380 = vadd.f32 %v379, %v365
    %v381 = vadd.f32 %v380, %v366
    %v382 = vadd.f32 %v381, %v367
    %v383 = vadd.f32 %v382, %v368
    %v384 = vadd.f32 %v383, %v369
    %v385 = vadd.f32 %v384, %v370
    %v386 = vadd.f32 %v385, %v371
    %v387 = vadd.f32 %v386, %v372
    %v388 = vadd.f32 %v387, %v373
    %v389 = vadd.f32 %v388, %v374
    %v390 = vadd.f32 %v389, %v375
    %v391 = vadd.f32 %v390, %v376
    %v392 = vadd.f32 %v391, %v377
    %v393 = vadd.f32 %v392, %v378
    %v394 = vrot.slane %v393, 4
    %v395 = vadd.f32 %v393, %v394
    %v396 = vrot.slane %v395, 2
    %v397 = vadd.f32 %v395, %v396
    %v398 = vrot.slane %v397, 1
    %v399 = vadd.f32 %v397, %v398
    %vm400 = vcmask 1040384
    %v401 = vsel %vm400, %v362, %v399
    %vm402 = vcmask 1041408
    %v403 = vsel %vm402, %v401, 0.0
    %404 = vst [vmem:[%s3] sm:$0xff] %v403
  $region17: #{resblock_forward.4} parent=0 // pred_fallthru
    _
  // Predicated region
  $region18: #{resblock_forward.4} parent=0 // pred_check
    _
  $region19: #{resblock_forward.4} parent=0 // pred_check_branch
    %406 = sbr.rel (0) target = $region21
  $region20: #{resblock_forward.4} parent=0 // pred_region
    _
  $region21: #{resblock_forward.4} parent=0 // pred_fallthru
    _
  // Predicated region
  $region22: #{resblock_forward.4} parent=0 // pred_check
    _
  $region23: #{resblock_forward.4} parent=0 // pred_check_branch
    %408 = sbr.rel (0) target = $region25
  $region24: #{resblock_forward.4} parent=0 // pred_region
    _
  $region25: #{resblock_forward.4} parent=0 // pred_fallthru
    _
  // Predicated region
  $region26: #{resblock_forward.4} parent=0 // pred_check
    _
  $region27: #{resblock_forward.4} parent=0 // pred_check_branch
    %410 = sbr.rel (0) target = $region29
  $region28: #{resblock_forward.4} parent=0 // pred_region
    _
  $region29: #{resblock_forward.4} parent=0 // pred_fallthru
    _
  // Predicated region
  $region30: #{resblock_forward.4} parent=0 // pred_check
    _
  $region31: #{resblock_forward.4} parent=0 // pred_check_branch
    %412 = sbr.rel (0) target = $region33
  $region32: #{resblock_forward.4} parent=0 // pred_region
    _
  $region33: #{resblock_forward.4} parent=0 // pred_fallthru
    _

</llo_original>
